<compile_context>
chip_gen: v5e
topology: v5e:2x2
jax: 0.10.0
libtpu: 0.0.40
codegen_flags: <defaults>
</compile_context>

<pallas_src>
import functools

import jax
import jax.numpy as jnp
from jax import lax
from jax.experimental import pallas as pl
from jax.experimental.pallas import tpu as pltpu

EPS = 1e-5
_DEFAULT_BLOCK_BYTES = 4 * 1024 * 1024   # ~4 MiB of input data per block
_VMEM_LIMIT_BYTES = 48 * 1024 * 1024     # headroom for 2x(in)+2x(out) buffers


def _pick_hw_tile(hw, c, itemsize, max_block_bytes):
    """Pick the lane-dim tile for the fused spatial axis.

    Returns (thw, n_blocks).  thw is either the full hw extent (always a legal
    block shape) or a multiple of 128 capped so one (1, c, thw) block holds at
    most ~max_block_bytes of input data.  The last block may be partial; the
    stats kernel masks the out-of-range lanes and pass 2 simply drops the
    out-of-range stores."""
    cap_elems = max(128, max_block_bytes // (itemsize * max(c, 1)))
    if hw <= cap_elems:
        return hw, 1
    thw = (cap_elems // 128) * 128
    return thw, pl.cdiv(hw, thw)


def _stats_kernel(x_ref, stats_ref, *, hw, thw, tiles_per_seg):
    """Pass 1: accumulate per-(n, c) sum and sum(x^2) over (masked) HW tiles."""
    s = pl.program_id(1)
    j = pl.program_id(2)

    @pl.when(j == 0)
    def _():
        stats_ref[...] = jnp.zeros_like(stats_ref)

    x = x_ref[...].astype(jnp.float32)                       # (1, C, thw)
    # Mask lanes past the true HW extent (tail tile / fully-OOB padded tile).
    start = (s * tiles_per_seg + j) * thw
    lane = lax.broadcasted_iota(jnp.int32, x.shape, 2)
    x = jnp.where(start + lane < hw, x, 0.0)

    ssum = jnp.sum(x, axis=-1)                                # (1, C)
    ssq = jnp.sum(x * x, axis=-1)                             # (1, C)
    # Lane-dense packed store: stats block is (1, 1, 2, C), C on the lane axis.
    stats_ref[...] += jnp.stack([ssum[0], ssq[0]], axis=0)[None, None]


def _normalize_kernel(x_ref, scale_ref, shift_ref, o_ref):
    """Pass 2: y = x * scale + shift (mean/var/affine pre-folded per (n, c))."""
    x = x_ref[...].astype(jnp.float32)                        # (1, C, thw)
    o_ref[...] = (x * scale_ref[...] + shift_ref[...]).astype(o_ref.dtype)


def ibn_forward(x, in_w, in_b, bn_w, bn_b, *,
                max_block_bytes=_DEFAULT_BLOCK_BYTES):
    """x: (N, C, H, W). Returns (N, C, H, W), same dtype as x."""
    N, C, H, W = x.shape
    half = C // 2
    rest = C - half
    hw = H * W
    itemsize = jnp.dtype(x.dtype).itemsize
    thw, n_blocks = _pick_hw_tile(hw, C, itemsize, max_block_bytes)

    # Split the HW reduction into 2 parallel partial-sum segments when N alone
    # cannot be split evenly across v7x's two TensorCores (harmless on 1-TC
    # chips: just one extra tiny accumulator block per n).
    n_seg = 2 if (N % 2 == 1 and n_blocks >= 2) else 1
    tiles_per_seg = pl.cdiv(n_blocks, n_seg)

    x3 = x.reshape(N, C, hw)

    # ---------------- Pass 1: per-(n, c) sum and sum(x^2) -----------------
    def x_stats_idx(n, s, j):
        # Clamp fully-out-of-range tiles (possible when n_seg does not divide
        # n_blocks) onto the last real block; their lanes are masked anyway.
        return (n, 0, jnp.minimum(s * tiles_per_seg + j, n_blocks - 1))

    stats = pl.pallas_call(
        functools.partial(_stats_kernel, hw=hw, thw=thw,
                          tiles_per_seg=tiles_per_seg),
        out_shape=jax.ShapeDtypeStruct((N, n_seg, 2, C), jnp.float32),
        grid=(N, n_seg, tiles_per_seg),
        in_specs=[pl.BlockSpec((1, C, thw), x_stats_idx)],
        out_specs=pl.BlockSpec((1, 1, 2, C), lambda n, s, j: (n, s, 0, 0)),
        compiler_params=pltpu.CompilerParams(
            dimension_semantics=("parallel", "parallel", "arbitrary"),
            vmem_limit_bytes=_VMEM_LIMIT_BYTES),
        cost_estimate=pl.CostEstimate(
            flops=3 * N * C * hw, transcendentals=0,
            bytes_accessed=N * C * hw * itemsize),
    )(x3)

    stats = jnp.sum(stats, axis=1)          # reduce partial segments -> (N, 2, C)
    sums = stats[:, 0, :]                   # (N, C)
    sqs = stats[:, 1, :]                    # (N, C)

    # ------------- Finalize statistics (tiny, plain JAX) ------------------
    in_w = in_w.astype(jnp.float32)
    in_b = in_b.astype(jnp.float32)
    bn_w = bn_w.astype(jnp.float32)
    bn_b = bn_b.astype(jnp.float32)

    # InstanceNorm2d: per-(n, c), biased variance.
    mean_in = sums[:, :half] / hw
    var_in = jnp.maximum(sqs[:, :half] / hw - mean_in * mean_in, 0.0)
    scale_in = in_w[None, :] * lax.rsqrt(var_in + EPS)               # (N, half)
    shift_in = in_b[None, :] - mean_in * scale_in

    # BatchNorm2d (training-mode batch stats): per-channel over N*H*W.
    cnt = N * hw
    mean_bn = jnp.sum(sums[:, half:], axis=0) / cnt                  # (rest,)
    var_bn = jnp.maximum(jnp.sum(sqs[:, half:], axis=0) / cnt
                         - mean_bn * mean_bn, 0.0)
    scale_bn = bn_w * lax.rsqrt(var_bn + EPS)
    shift_bn = bn_b - mean_bn * scale_bn
    # TODO(synk): BatchNorm running-mean/var buffer updates (training-time side
    # effect) are not materialized; only the forward output is produced.

    scale = jnp.concatenate(
        [scale_in, jnp.broadcast_to(scale_bn[None, :], (N, rest))], axis=1)
    shift = jnp.concatenate(
        [shift_in, jnp.broadcast_to(shift_bn[None, :], (N, rest))], axis=1)
    scale = scale[:, :, None]    # (N, C, 1)
    shift = shift[:, :, None]    # (N, C, 1)

    # ---------------- Pass 2: y = x * scale + shift ------------------------
    out3 = pl.pallas_call(
        _normalize_kernel,
        out_shape=jax.ShapeDtypeStruct((N, C, hw), x.dtype),
        grid=(N, n_blocks),
        in_specs=[pl.BlockSpec((1, C, thw), lambda n, j: (n, 0, j)),
                  pl.BlockSpec((1, C, 1), lambda n, j: (n, 0, 0)),
                  pl.BlockSpec((1, C, 1), lambda n, j: (n, 0, 0))],
        out_specs=pl.BlockSpec((1, C, thw), lambda n, j: (n, 0, j)),
        compiler_params=pltpu.CompilerParams(
            dimension_semantics=("parallel", "parallel"),
            vmem_limit_bytes=_VMEM_LIMIT_BYTES),
        cost_estimate=pl.CostEstimate(
            flops=2 * N * C * hw, transcendentals=0,
            bytes_accessed=2 * N * C * hw * itemsize),
    )(x3, scale, shift)

    return out3.reshape(N, C, H, W)


def ibn_reference(x, in_w, in_b, bn_w, bn_b):
    """Pure-JAX reference mirroring the PyTorch forward (training-mode BN)."""
    N, C, H, W = x.shape
    half = C // 2
    x_in, x_bn = x[:, :half], x[:, half:]

    mu = jnp.mean(x_in, axis=(2, 3), keepdims=True)
    var = jnp.mean((x_in - mu) ** 2, axis=(2, 3), keepdims=True)
    y_in = (x_in - mu) / jnp.sqrt(var + EPS)
    y_in = y_in * in_w[None, :, None, None] + in_b[None, :, None, None]

    mu = jnp.mean(x_bn, axis=(0, 2, 3), keepdims=True)
    var = jnp.mean((x_bn - mu) ** 2, axis=(0, 2, 3), keepdims=True)
    y_bn = (x_bn - mu) / jnp.sqrt(var + EPS)
    y_bn = y_bn * bn_w[None, :, None, None] + bn_b[None, :, None, None]

    return jnp.concatenate([y_in, y_bn], axis=1)


if __name__ == "__main__":
    def _check(x, planes, **fwd_kwargs):
        half = planes // 2
        rest = planes - half
        # PyTorch default parameter init: affine weight = 1, bias = 0.
        in_w = jnp.ones((half,), jnp.float32)
        in_b = jnp.zeros((half,), jnp.float32)
        bn_w = jnp.ones((rest,), jnp.float32)
        bn_b = jnp.zeros((rest,), jnp.float32)

        out = jax.block_until_ready(
            ibn_forward(x, in_w, in_b, bn_w, bn_b, **fwd_kwargs))
        ref = ibn_reference(x, in_w, in_b, bn_w, bn_b)

        assert out.shape == x.shape and out.dtype == x.dtype
        err = float(jnp.max(jnp.abs(out - ref)))
        assert jnp.allclose(out, ref, atol=1e-4, rtol=1e-4), err

    key = jax.random.PRNGKey(0)
    k1, k2 = jax.random.split(key)

    # Primary case: batch=2, planes=4, 16x16 spatial (single HW block).
    x1 = jax.random.normal(k1, (2, 4, 16, 16), dtype=jnp.float32)
    _check(x1, 4)

    # Second case exercises the multi-tile path with tail masking, a clamped
    # fully-out-of-range tile, odd channel split, and the N-odd segment split:
    # N=1, planes=6, 18x18 -> hw=324 with a tiny artificial block cap.
    x2 = jax.random.normal(k2, (1, 6, 18, 18), dtype=jnp.float32)
    _check(x2, 6, max_block_bytes=6 * 4 * 128)

    print("KERNEL_OK")
</pallas_src>

<mosaic_0001>
module attributes {stable_mosaic.version = 11 : i64} {
  func.func @_stats_kernel(%arg0: i32, %arg1: i32, %arg2: i32, %arg3: memref<1x4x256xf32, #tpu.memory_space<vmem>>, %arg4: memref<1x1x2x4xf32, #tpu.memory_space<vmem>>) attributes {dimension_semantics = [#tpu.dimension_semantics<parallel>, #tpu.dimension_semantics<parallel>, #tpu.dimension_semantics<arbitrary>], iteration_bounds = array<i64: 2, 1, 1>, scalar_prefetch = 0 : i64, scratch_operands = 0 : i64, tpu.core_type = #tpu.core_type<tc>, window_params = [{transform_indices = @transform_0, window_bounds = array<i64: 1, 4, 256>}, {transform_indices = @transform_1, window_bounds = array<i64: 1, 1, 2, 4>}]} {
    %c0_i32 = arith.constant 0 : i32
    %0 = arith.cmpi eq, %arg2, %c0_i32 : i32
    %1 = arith.extui %0 : i1 to i32
    %c0_i32_0 = arith.constant 0 : i32
    %2 = arith.cmpi ne, %1, %c0_i32_0 : i32
    scf.if %2 {
      %cst_14 = arith.constant 0.000000e+00 : f32
      %26 = vector.broadcast %cst_14 : f32 to vector<1x1x2x4xf32>
      %c0_15 = arith.constant 0 : index
      %c0_16 = arith.constant 0 : index
      %c0_17 = arith.constant 0 : index
      %c0_18 = arith.constant 0 : index
      %27 = vector.load %arg4[%c0_15, %c0_16, %c0_17, %c0_18] : memref<1x1x2x4xf32, #tpu.memory_space<vmem>>, vector<1x1x2x4xf32>
      tpu.vector_store %arg4[%c0_15, %c0_16, %c0_17, %c0_18], %26 {strides = array<i32>} : memref<1x1x2x4xf32, #tpu.memory_space<vmem>>, vector<1x1x2x4xf32>,
    } else {
    }
    %c0 = arith.constant 0 : index
    %c0_1 = arith.constant 0 : index
    %c0_2 = arith.constant 0 : index
    %3 = vector.load %arg3[%c0, %c0_1, %c0_2] : memref<1x4x256xf32, #tpu.memory_space<vmem>>, vector<1x4x256xf32>
    %c1_i32 = arith.constant 1 : i32
    %4 = arith.muli %arg1, %c1_i32 : i32
    %5 = arith.addi %4, %arg2 : i32
    %c256_i32 = arith.constant 256 : i32
    %6 = arith.muli %5, %c256_i32 : i32
    %7 = tpu.iota {dimensions = array<i32: 2>} : vector<1x4x256xi32>
    %8 = vector.broadcast %6 : i32 to vector<1x4x256xi32>
    %9 = arith.addi %8, %7 : vector<1x4x256xi32>
    %c256_i32_3 = arith.constant 256 : i32
    %10 = vector.broadcast %c256_i32_3 : i32 to vector<1x4x256xi32>
    %11 = arith.cmpi slt, %9, %10 : vector<1x4x256xi32>
    %cst = arith.constant 0.000000e+00 : f32
    %12 = vector.broadcast %cst : f32 to vector<1x4x256xf32>
    %13 = arith.select %11, %3, %12 : vector<1x4x256xi1>, vector<1x4x256xf32>
    %cst_4 = arith.constant dense<0.000000e+00> : vector<1x4xf32>
    %14 = vector.multi_reduction <add>, %13, %cst_4 [2] : vector<1x4x256xf32> to vector<1x4xf32>
    %15 = arith.mulf %13, %13 : vector<1x4x256xf32>
    %cst_5 = arith.constant dense<0.000000e+00> : vector<1x4xf32>
    %16 = vector.multi_reduction <add>, %15, %cst_5 [2] : vector<1x4x256xf32> to vector<1x4xf32>
    %c0_6 = arith.constant 0 : index
    %c0_7 = arith.constant 0 : index
    %c0_8 = arith.constant 0 : index
    %c0_9 = arith.constant 0 : index
    %17 = vector.load %arg4[%c0_6, %c0_7, %c0_8, %c0_9] : memref<1x1x2x4xf32, #tpu.memory_space<vmem>>, vector<1x1x2x4xf32>
    %18 = vector.shape_cast %14 : vector<1x4xf32> to vector<4xf32>
    %19 = vector.shape_cast %16 : vector<1x4xf32> to vector<4xf32>
    %20 = vector.shape_cast %18 : vector<4xf32> to vector<1x4xf32>
    %21 = vector.shape_cast %19 : vector<4xf32> to vector<1x4xf32>
    %22 = tpu.concatenate %20, %21 in 0 : vector<1x4xf32>, vector<1x4xf32> -> vector<2x4xf32>
    %23 = vector.shape_cast %22 : vector<2x4xf32> to vector<1x1x2x4xf32>
    %24 = arith.addf %17, %23 : vector<1x1x2x4xf32>
    %c0_10 = arith.constant 0 : index
    %c0_11 = arith.constant 0 : index
    %c0_12 = arith.constant 0 : index
    %c0_13 = arith.constant 0 : index
    %25 = vector.load %arg4[%c0_10, %c0_11, %c0_12, %c0_13] : memref<1x1x2x4xf32, #tpu.memory_space<vmem>>, vector<1x1x2x4xf32>
    tpu.vector_store %arg4[%c0_10, %c0_11, %c0_12, %c0_13], %24 {strides = array<i32>} : memref<1x1x2x4xf32, #tpu.memory_space<vmem>>, vector<1x1x2x4xf32>,
    return
  }
  func.func @transform_0(%arg0: i32, %arg1: i32, %arg2: i32) -> (i32, i32, i32) {
    %c1_i32 = arith.constant 1 : i32
    %0 = arith.muli %arg1, %c1_i32 : i32
    %1 = arith.addi %0, %arg2 : i32
    %c0_i32 = arith.constant 0 : i32
    %2 = arith.minsi %1, %c0_i32 : i32
    %c0_i32_0 = arith.constant 0 : i32
    %c0_i32_1 = arith.constant 0 : i32
    return %arg0, %c0_i32_0, %2 : i32, i32, i32
  }
  func.func @transform_1(%arg0: i32, %arg1: i32, %arg2: i32) -> (i32, i32, i32, i32) {
    %c0_i32 = arith.constant 0 : i32
    %c0_i32_0 = arith.constant 0 : i32
    %c0_i32_1 = arith.constant 0 : i32
    return %arg0, %arg1, %c0_i32, %c0_i32_0 : i32, i32, i32, i32
  }
}

</mosaic_0001>

<llo_original>
// kernel: tpu_custom_call.1
$region0: #{tpu_custom_call.1}
  #allocation0 [shape = 'u32[]', space=smem, size = 0x4, offset = 0x4, fixed_abs, tag = 'smem constant byte address 0x4 - core index']
  #allocation1 [shape = 'u32[72,128]{1,0:T(1,128)}', space=vmem, size = 0x9000, scoped, tag = 'internal scratch']
  %s0 = inlined_call_operand.hbm [shape: f32[2,4,256], index: 0, kind: input, shape index: {}]
  %s1 = inlined_call_operand.hbm [shape: f32[2,1,2,4], index: 1, kind: output, shape index: {}]
  %s2 = sld [smem:[#allocation0]]
  $region45: #{tpu_custom_call.1} parent=0
    _
  %s4 = ssub.s32 1, %s2
  %s5 = scalar_select 0, %s4, %s2
  $region1: #{tpu_custom_call.1} parent=0
    #allocation2 [shape = 'u8[8192]{0}', space=vmem, size = 0x2000, scoped, tag = 'input window, operand 0']
    #allocation3 [shape = 's32[2]{0}', space=sflag, size = 0x8, scoped, tag = 'scoped memory for tpu_custom_call.1']
    #allocation4 [shape = 's32[2]{0}', space=sflag, size = 0x8, scoped, tag = 'scoped memory for tpu_custom_call.1']
    #allocation5 [shape = 'u8[2048]{0}', space=vmem, size = 0x800, scoped, tag = 'output window, operand 0']
    %6 = vsyncpa [#allocation3], 0
    %s7 = scalar_lea.sflag [#allocation3], 1
    %8 = vsyncpa %s7, 0
    %9 = vsyncpa [#allocation4], 0
    %s10 = scalar_lea.sflag [#allocation4], 1
    %11 = vsyncpa %s10, 0
    loop: start=0, step=1, limit=4
    $region2: #{tpu_custom_call.1} parent=1 // loop_pre_header
      _
    $region3: #{tpu_custom_call.1} parent=1 // loop_header
      %s13 = sphi 0, %s17
      %p14 = scmp.ge.s32.totalorder %s13, 4
      %s20 = sphi 0, %s39
      %s21 = sphi 0, %s35
      %s22 = sphi 0, %s31
      %s23 = sphi 0, %s20
      %s24 = sphi 0, %s21
      %s25 = sphi 0, %s22
      %s26 = sphi 0, %s23
      %s27 = sphi 0, %s24
      %s28 = sphi 0, %s25
      %s50 = sphi 0, %s52
      %s53 = sphi 0, %s50
      %s54 = sphi 0, %s53
      %s70 = sphi 0, %s54
      %s78 = sphi 0, %s80
      %s81 = sphi 0, %s78
      %s82 = sphi 0, %s81
      %s98 = sphi 0, %s82
    $region4: #{tpu_custom_call.1} parent=1 // loop_header_branch
      %16 = sbr.rel (%p14) target = $region8
    $region5: #{tpu_custom_call.1} parent=1 // loop_body
      %s18 = ssub.s32 %s13, 1
      %s19 = ssub.s32 %s13, 2
      %s29 = sadd.s32 1, %s22
      %p30 = scmp.ge.s32.totalorder %s29, 1
      %s31 = scalar_select %p30, 0, %s29
      %s32 = sadd.s32 1, %s21
      %s33 = scalar_select %p30, %s32, %s21
      %p34 = scmp.ge.s32.totalorder %s33, 1
      %s35 = scalar_select %p34, 0, %s33
      %s36 = sadd.s32 1, %s20
      %s37 = scalar_select %p34, %s36, %s20
      %p38 = scmp.ge.s32.totalorder %s37, 2
      %s39 = scalar_select %p38, 0, %s37
      %s40 = sadd.s32 %s21, %s22
      %p41 = scmp.lt.s32.totalorder %s40, 0
      %s42 = scalar_select %p41, %s40, 0
      %s43 = sadd.s32 %s35, %s31
      %p44 = scmp.lt.s32.totalorder %s43, 0
      %s45 = scalar_select %p44, %s43, 0
      %s46 = ssub.s32 %s20, %s39
      %s47 = ssub.s32 %s42, %s45
      %s48 = sor.u32 %s46, %s47
      %p49 = scmp.eq.s32.totalorder %s48, 0
      %s51 = sadd.s32 %s50, 1
      %s52 = scalar_select %p49, %s50, %s51
      %p55 = pneg %p49
      %p56 = scmp.eq.s32.totalorder %s13, 1
      %p57 = por %p55, %p56
      %p58 = scmp.ne.s32.totalorder %s50, %s53
      %p59 = scmp.eq.s32.totalorder %s13, 0
      %p60 = por %p58, %p59
      %p61 = scmp.ne.s32.totalorder %s50, %s53
      %p62 = scmp.eq.s32.totalorder %s18, 1
      %p63 = por %p61, %p62
      %p64 = scmp.ne.s32.totalorder %s53, %s54
      %p65 = scmp.eq.s32.totalorder %s18, 0
      %p66 = por %p64, %p65
      %p67 = scmp.ne.s32.totalorder %s53, %s54
      %p68 = scmp.eq.s32.totalorder %s19, 1
      %p69 = por %p67, %p68
      %p71 = scmp.ne.s32.totalorder %s54, %s70
      %p72 = scmp.eq.s32.totalorder %s19, 0
      %p73 = por %p71, %p72
      %s74 = ssub.s32 %s20, %s39
      %s75 = ssub.s32 %s21, %s35
      %s76 = sor.u32 %s74, %s75
      %p77 = scmp.eq.s32.totalorder %s76, 0
      %s79 = sadd.s32 %s78, 1
      %s80 = scalar_select %p77, %s78, %s79
      %p83 = pneg %p77
      %p84 = scmp.eq.s32.totalorder %s13, 1
      %p85 = por %p83, %p84
      %p86 = scmp.ne.s32.totalorder %s78, %s81
      %p87 = scmp.eq.s32.totalorder %s13, 0
      %p88 = por %p86, %p87
      %p89 = scmp.ne.s32.totalorder %s78, %s81
      %p90 = scmp.eq.s32.totalorder %s18, 1
      %p91 = por %p89, %p90
      %p92 = scmp.ne.s32.totalorder %s81, %s82
      %p93 = scmp.eq.s32.totalorder %s18, 0
      %p94 = por %p92, %p93
      %p95 = scmp.ne.s32.totalorder %s81, %s82
      %p96 = scmp.eq.s32.totalorder %s19, 1
      %p97 = por %p95, %p96
      %p99 = scmp.ne.s32.totalorder %s82, %s98
      %p100 = scmp.eq.s32.totalorder %s19, 0
      %p101 = por %p99, %p100
      %p102 = scmp.le.s32.totalorder 1, %s13
      %p103 = scmp.lt.s32.totalorder %s13, 3
      %p104 = pnand %p102, %p103
      %p105 = pneg %p104
      // Predicated region
      $region9: #{tpu_custom_call.1} parent=5 // pred_check
        _
      $region10: #{tpu_custom_call.1} parent=5 // pred_check_branch
        %107 = sbr.rel (%p104) target = $region12
      $region11: #{tpu_custom_call.1} parent=5 // pred_region
        %s108 = ssub.s32 %s13, 1
      $region12: #{tpu_custom_call.1} parent=5 // pred_fallthru
        _
      %p109 = scmp.lt.s32.totalorder %s13, 2
      // Predicated region
      $region13: #{tpu_custom_call.1} parent=5 // pred_check
        %p110 = pneg %p109
      $region14: #{tpu_custom_call.1} parent=5 // pred_check_branch
        %112 = sbr.rel (%p110) target = $region16
      $region15: #{tpu_custom_call.1} parent=5 // pred_region
        // Predicated region
        $region17: #{tpu_custom_call.1} parent=15 // pred_check
          %p113 = pneg %p60
        $region18: #{tpu_custom_call.1} parent=15 // pred_check_branch
          %115 = sbr.rel (%p113) target = $region20
        $region19: #{tpu_custom_call.1} parent=15 // pred_region
          %s116 = sand.u32 %s50, 1
          %s117 = scalar_lea.sflag [#allocation3], %s116
          %s118 = sand.u32 %s50, 1
          %s119 = smul.addr %s118, 8
          %s120 = scalar_lea.vmem [#allocation2], %s119
          %s121 = sadd.s32 %s21, %s22
          %p122 = scmp.lt.s32.totalorder %s121, 0
          %s123 = scalar_select %p122, %s121, 0
          %s124 = smul.u32 2, %s123
          %126 = vsyncadd %s117, 0
          %s127 = smul.addr %s20, 2
          %s128 = sadd.s32 %s124, %s127
          %s129 = smul.addr %s128, 4
          %s130 = scalar_lea.hbm %s0, %s129
          %s132 = sshll.u32 %s130, 4
          %s133 = int_to_ptr.hbm [resolvable:$true] %s132
          %s134 = sshll.u32 %s120, 4
          %s135 = int_to_ptr.vmem [resolvable:$true] %s134
          %137 = dma.hbm_to_vmem [thread:$0]  %s133, 128, %s135, %s117
        $region20: #{tpu_custom_call.1} parent=15 // pred_fallthru
          _
      $region16: #{tpu_custom_call.1} parent=5 // pred_fallthru
        _
      %p138 = scmp.le.s32.totalorder 1, %s13
      %p139 = scmp.lt.s32.totalorder %s13, 3
      %p140 = pnand %p138, %p139
      %p141 = pneg %p140
      // Predicated region
      $region21: #{tpu_custom_call.1} parent=5 // pred_check
        _
      $region22: #{tpu_custom_call.1} parent=5 // pred_check_branch
        %143 = sbr.rel (%p140) target = $region24
      $region23: #{tpu_custom_call.1} parent=5 // pred_region
        %s144 = ssub.s32 %s13, 1
        %s145 = sand.u32 %s53, 1
        %s146 = scalar_lea.sflag [#allocation3], %s145
        %s147 = sand.u32 %s53, 1
        %s148 = smul.addr %s147, 8
        %s149 = scalar_lea.vmem [#allocation2], %s148
        // Predicated region
        $region25: #{tpu_custom_call.1} parent=23 // pred_check
          %p150 = pneg %p66
        $region26: #{tpu_custom_call.1} parent=23 // pred_check_branch
          %152 = sbr.rel (%p150) target = $region28
        $region27: #{tpu_custom_call.1} parent=23 // pred_region
          %154 = dma.done %s146, 128
        $region28: #{tpu_custom_call.1} parent=23 // pred_fallthru
          _
        %s155 = sand.u32 %s53, 1
        %s156 = scalar_lea.sflag [#allocation3], %s155
        %s157 = sand.u32 %s53, 1
        %s158 = smul.addr %s157, 8
        %s159 = scalar_lea.vmem [#allocation2], %s158
        %p160 = pneg %p66
        %p161 = pneg %p63
        %p162 = pneg %p94
        %p163 = pneg %p91
        %s164 = sand.u32 %s81, 1
        %s165 = scalar_lea.sflag [#allocation4], %s164
        %s166 = sand.u32 %s81, 1
        %s167 = smul.addr %s166, 2
        %s168 = scalar_lea.vmem [#allocation5], %s167
        %s169 = sadd.s32 %s24, %s25
        %p170 = scmp.lt.s32.totalorder %s169, 0
        %s171 = scalar_select %p170, %s169, 0
        %s172 = smul.u32 2, %s171
        %p173 = scmp.eq.s32.totalorder %s25, 0
        // Predicated region
        $region29: #{tpu_custom_call.1} parent=23 // pred_check
          %p174 = pneg %p173
        $region30: #{tpu_custom_call.1} parent=23 // pred_check_branch
          %176 = sbr.rel (%p174) target = $region32
        $region31: #{tpu_custom_call.1} parent=23 // pred_region
          %vm177 = vcmask 25600
          %178 = vst.msk [vmem:[%s168] sm:$0x3] %vm177, 0.0
        $region32: #{tpu_custom_call.1} parent=23 // pred_fallthru
          _
        %v179 = vld [vmem:[%s149] sm:$0xff]
        %s180 = sadd.s32 %s24, %s25
        %s181 = smul.u32 %s180, 256
        %v182 = vlaneseq
        %v183 = vand.u32 %v182, 127
        %v184 = vadd.s32 %v183, 128
        %v185 = vstv %s181
        %v186 = vadd.s32 %v185, %v183
        %v187 = vadd.s32 %v185, %v184
        %vm188 = vcmp.lt.s32.totalorder %v186, 256
        %vm189 = vcmp.lt.s32.totalorder %v187, 256
        %191 = vst [vmem:[#allocation1] ss:$2 sm:$0xff] %v179
        %v192 = vld.sshfl [vmem:[#allocation1] sm:$0xff pattern:$0x75316420]
        %v193 = vld.sshfl [vmem:[#allocation1 + $0x8] sm:$0xff pattern:$0x75316420]
        %v196 = vsel %vm188, %v192, 0.0
        %v197 = vsel %vm189, %v193, 0.0
        %vm198 = vcmask 1043456
        %v199 = vsel %vm198, %v196, 0.0
        %v200 = vsel %vm198, %v197, 0.0
        %v201 = vadd.f32 %v199, %v200
        %202 = vadd.xlane.f32.xlu0 %v201
        %v203 = vpop.xlane.xlu0 %202
        %v204 = vmul.f32 %v196, %v196
        %v205 = vmul.f32 %v197, %v197
        %v206 = vsel %vm198, %v204, 0.0
        %v207 = vsel %vm198, %v205, 0.0
        %v208 = vadd.f32 %v206, %v207
        %209 = vadd.xlane.f32.xlu0 %v208
        %v210 = vpop.xlane.xlu0 %209
        %v211 = vld [vmem:[%s168] sm:$0x3]
        %v213 = vperm.slane %v203, %v183
        %v216 = vperm.slane %v210, %v183
        %vm218 = vcmask 1040384
        %v219 = vsel %vm218, %v213, %v216
        %v220 = vadd.f32 %v211, %v219
        %vm221 = vcmask 25600
        %222 = vst.msk [vmem:[%s168] sm:$0x3] %vm221, %v220
        %s223 = sand.u32 %s81, 1
        %s224 = scalar_lea.sflag [#allocation4], %s223
        %s225 = sand.u32 %s81, 1
        %s226 = smul.addr %s225, 2
        %s227 = scalar_lea.vmem [#allocation5], %s226
        // Predicated region
        $region33: #{tpu_custom_call.1} parent=23 // pred_check
          %p228 = pneg %p91
        $region34: #{tpu_custom_call.1} parent=23 // pred_check_branch
          %230 = sbr.rel (%p228) target = $region36
        $region35: #{tpu_custom_call.1} parent=23 // pred_region
          %232 = vsyncadd %s224, 0
          %s233 = sadd.s32 %s24, %s23
          %s234 = smul.addr %s233, 2
          %s235 = scalar_lea.hbm %s1, %s234
          %s237 = sshll.u32 %s227, 4
          %s238 = int_to_ptr.vmem [resolvable:$true] %s237
          %s239 = sshll.u32 %s235, 4
          %s240 = int_to_ptr.hbm [resolvable:$true] %s239
          %242 = dma.vmem_to_hbm [thread:$0]  %s238, 32, %s240, %s224
        $region36: #{tpu_custom_call.1} parent=23 // pred_fallthru
          _
      $region24: #{tpu_custom_call.1} parent=5 // pred_fallthru
        _
      %p243 = scmp.le.s32.totalorder 2, %s13
      // Predicated region
      $region37: #{tpu_custom_call.1} parent=5 // pred_check
        %p244 = pneg %p243
      $region38: #{tpu_custom_call.1} parent=5 // pred_check_branch
        %246 = sbr.rel (%p244) target = $region40
      $region39: #{tpu_custom_call.1} parent=5 // pred_region
        %s247 = ssub.s32 %s13, 2
        // Predicated region
        $region41: #{tpu_custom_call.1} parent=39 // pred_check
          %p248 = pneg %p97
        $region42: #{tpu_custom_call.1} parent=39 // pred_check_branch
          %250 = sbr.rel (%p248) target = $region44
        $region43: #{tpu_custom_call.1} parent=39 // pred_region
          %s251 = sand.u32 %s82, 1
          %s252 = scalar_lea.sflag [#allocation4], %s251
          %s253 = sand.u32 %s82, 1
          %s254 = smul.addr %s253, 2
          %s255 = scalar_lea.vmem [#allocation5], %s254
          %257 = dma.done %s252, 32
        $region44: #{tpu_custom_call.1} parent=39 // pred_fallthru
          _
      $region40: #{tpu_custom_call.1} parent=5 // pred_fallthru
        _
    $region6: #{tpu_custom_call.1} parent=1 // loop_footer
      %s17 = sadd.s32 1, %s13
    $region7: #{tpu_custom_call.1} parent=1 // loop_footer_branch
      %12 = sbr.rel target = $region3
    $region8: #{tpu_custom_call.1} parent=1 // loop_exit
      _
    %258 = vsyncpa [#allocation3], 1
    %s259 = scalar_lea.sflag [#allocation3], 1
    %260 = vsyncpa %s259, 1
    %261 = vsyncpa [#allocation4], 1
    %s262 = scalar_lea.sflag [#allocation4], 1
    %263 = vsyncpa %s262, 1

</llo_original>
